<compile_context>
chip_gen: v6e
topology: v6e:2x2x1
jax: 0.10.0
libtpu: 0.0.40
codegen_flags: <defaults>
</compile_context>

<pallas_src>
import math

import jax
import jax.numpy as jnp
from jax import lax
from jax.experimental import pallas as pl
from jax.experimental.pallas import tpu as pltpu


# ----------------------------------------------------------------------------
# Kernels
# ----------------------------------------------------------------------------
def _gather_vmem_kernel(idx_ref, data_ref, out_ref):
    """Dataset fully resident in VMEM; gather G rows per grid step."""
    G = out_ref.shape[0]
    base = pl.program_id(0) * G

    def body(g, carry):
        out_ref[g] = data_ref[idx_ref[base + g]]
        return carry

    # Moderate unroll: lets the scheduler co-issue vld/vst across rows without
    # blowing up instruction count at G ~ 256.
    lax.fori_loop(0, G, body, 0, unroll=min(8, G))


def _gather_dma_kernel(idx_ref, data_hbm, out_hbm, buf, row_sems, out_sems):
    """Dataset and output stay in HBM; manual double-buffered row-gather DMAs.

    idx_ref : SMEM (B_pad,) int32 scalar-prefetched indices
    data_hbm: (N, R, 128) ref left in HBM (memory_space=pl.ANY)
    out_hbm : (B_pad, R, 128) output ref left in HBM (memory_space=pl.ANY)
    buf     : VMEM (2, G, R, 128) double buffer
    row_sems: DMA semaphores (2, G) for the per-row gather DMAs
    out_sems: DMA semaphores (2,)  for the group writeback DMAs
    """
    step = pl.program_id(0)
    nsteps = pl.num_programs(0)
    G = buf.shape[1]
    slot = step & 1

    def start_group(s, which_slot):
        @pl.loop(0, G)
        def _(g):
            row = idx_ref[s * G + g]
            pltpu.make_async_copy(
                data_hbm.at[row], buf.at[which_slot, g],
                row_sems.at[which_slot, g],
            ).start()

    # Prologue: prime slot 0 with group 0.
    @pl.when(step == 0)
    def _():
        start_group(0, 0)

    # Before reusing the other slot for the next group's row DMAs, make sure
    # its previous writeback DMA (issued at step-1) has fully drained.
    # (Indices in the wait descriptor are shape-only; only sizes matter.)
    @pl.when(step >= 1)
    def _():
        pltpu.make_async_copy(
            buf.at[1 - slot], out_hbm.at[pl.ds(0, G)], out_sems.at[1 - slot]
        ).wait()

    # Prefetch the next group of rows into the other slot while this one is
    # consumed.
    @pl.when(step + 1 < nsteps)
    def _():
        start_group(step + 1, 1 - slot)

    # Wait for this group's row DMAs (data_hbm.at[0] is shape-only).
    @pl.loop(0, G)
    def _(g):
        pltpu.make_async_copy(
            data_hbm.at[0], buf.at[slot, g], row_sems.at[slot, g]
        ).wait()

    # Ship the gathered group straight to its HBM output slice — no vreg copy.
    pltpu.make_async_copy(
        buf.at[slot], out_hbm.at[pl.ds(step * G, G)], out_sems.at[slot]
    ).start()

    # Drain the final writeback before the kernel retires.
    @pl.when(step == nsteps - 1)
    def _():
        pltpu.make_async_copy(
            buf.at[slot], out_hbm.at[pl.ds(0, G)], out_sems.at[slot]
        ).wait()


# ----------------------------------------------------------------------------
# Wrapper
# ----------------------------------------------------------------------------
def _flatten_lane_dense(dataset):
    """(N, ...) -> (N, R, 128) with zero padding of the feature axis."""
    N = dataset.shape[0]
    feat = int(math.prod(dataset.shape[1:]))
    pad = (-feat) % 128
    flat = dataset.reshape(N, feat)
    if pad:
        flat = jnp.pad(flat, ((0, 0), (0, pad)))
    R = (feat + pad) // 128
    return flat.reshape(N, R, 128), feat


def _vmem_limit_bytes():
    """Per-generation VMEM budget with headroom (v7x: 64 MiB/TC)."""
    try:
        cap = int(pltpu.get_tpu_info().vmem_capacity_bytes)
    except Exception:
        cap = 64 << 20  # conservative: assume v7x-sized VMEM
    # Leave headroom for the rest of the program / other scoped allocations.
    return max(16 << 20, min(cap - (16 << 20), int(cap * 3 // 4)))


def gather_rows_lane_dense(data3, feat, trailing_shape, indices, *,
                           target_block_bytes=1 << 20, force_dma=False):
    """impute[b] = row indices[b] of the cached lane-dense (N, R, 128) slab."""
    N, R, L = data3.shape
    B = int(indices.shape[0])
    itemsize = jnp.dtype(data3.dtype).itemsize
    row_bytes = R * L * itemsize
    data_bytes = N * row_bytes

    # Clamp: manual / index-map DMAs have no runtime OOB check on TPU.
    idx = jnp.clip(indices.astype(jnp.int32), 0, N - 1)

    # Group size: ~target_block_bytes per grid step (up to 256 rows), then
    # re-balanced so padded-tail waste is < one group.
    G = max(1, min(B, 256, max(1, target_block_bytes // row_bytes)))
    nsteps = pl.cdiv(B, G)
    G = pl.cdiv(B, nsteps)
    B_pad = nsteps * G
    if B_pad != B:
        # NOTE: padded tail indices (zeros) do real but harmless work.
        idx = jnp.concatenate([idx, jnp.zeros((B_pad - B,), jnp.int32)])
    block_bytes = G * row_bytes

    vmem_limit = _vmem_limit_bytes()
    # Budget 2x dataset (input block may be double-buffered even though its
    # index map is constant) + double-buffered output block + slack.
    use_vmem = (not force_dma) and (
        2 * data_bytes + 2 * block_bytes + (1 << 20) <= vmem_limit)

    if use_vmem:
        # Whole dataset resident in VMEM; gather is pure in-VMEM row copies,
        # hidden behind the lane-dense output writeback.
        out3 = pl.pallas_call(
            _gather_vmem_kernel,
            out_shape=jax.ShapeDtypeStruct((B_pad, R, L), data3.dtype),
            grid_spec=pltpu.PrefetchScalarGridSpec(
                num_scalar_prefetch=1,
                grid=(nsteps,),
                in_specs=[pl.BlockSpec((N, R, L), lambda s, idx: (0, 0, 0))],
                out_specs=pl.BlockSpec((G, R, L), lambda s, idx: (s, 0, 0)),
            ),
            compiler_params=pltpu.CompilerParams(
                # Steps are independent -> shardable across v7x's 2 TCs.
                dimension_semantics=("parallel",),
                vmem_limit_bytes=vmem_limit,
            ),
        )(idx, data3)
    else:
        # Large dataset: leave data AND output in HBM; gather G rows/step with
        # manual double-buffered row DMAs, then DMA each group straight to its
        # HBM output slice (steps are chained -> "arbitrary").
        out3 = pl.pallas_call(
            _gather_dma_kernel,
            out_shape=jax.ShapeDtypeStruct((B_pad, R, L), data3.dtype),
            grid_spec=pltpu.PrefetchScalarGridSpec(
                num_scalar_prefetch=1,
                grid=(nsteps,),
                in_specs=[pl.BlockSpec(memory_space=pl.ANY)],
                out_specs=pl.BlockSpec(memory_space=pl.ANY),
                scratch_shapes=[
                    pltpu.VMEM((2, G, R, L), data3.dtype),
                    pltpu.SemaphoreType.DMA((2, G)),
                    pltpu.SemaphoreType.DMA((2,)),
                ],
            ),
            compiler_params=pltpu.CompilerParams(
                dimension_semantics=("arbitrary",),
                vmem_limit_bytes=vmem_limit,
            ),
        )(idx, data3)

    # Undo batch/feature padding (metadata-only reshape when nothing was
    # padded, which is the common aligned case).
    if B_pad == B and R * L == feat:
        return out3.reshape((B,) + tuple(trailing_shape))
    out_flat = out3.reshape(B_pad, R * L)[:B, :feat]
    return out_flat.reshape((B,) + tuple(trailing_shape))


def sample_gather(dataset, indices, **kwargs):
    """Convenience: flatten + gather (use the module for the cached path)."""
    data3, feat = _flatten_lane_dense(dataset)
    return gather_rows_lane_dense(data3, feat, dataset.shape[1:], indices,
                                  **kwargs)


# ----------------------------------------------------------------------------
# Module port
# ----------------------------------------------------------------------------
class DatasetSamplingImputation:
    """JAX/Pallas port of the PyTorch DatasetSamplingImputation module.

    The torch DataLoader (shuffle=True, wrap-around with a *fresh* shuffle when
    the epoch ends) is emulated with one independent PRNG permutation per
    wrapped epoch, concatenated and truncated to `batch_size` indices.
    """

    def __init__(self, dataset_to_impute, key):
        self.dataset = jnp.asarray(dataset_to_impute)  # (N, C, H, W)
        # Cache the lane-dense padded slab ONCE (avoids a full-dataset HBM
        # rewrite on every forward call).
        self._data3, self._feat = _flatten_lane_dense(self.dataset)
        self._key = key

    def _next_indices(self, batch_size):
        n = self.dataset.shape[0]
        reps = -(-batch_size // n)  # number of "epochs" needed
        keys = jax.random.split(self._key, reps + 1)
        self._key = keys[0]
        perms = [jax.random.permutation(k, n) for k in keys[1:]]
        return jnp.concatenate(perms)[:batch_size].astype(jnp.int32)

    def forward(self, x, mask=None, index=None):
        # TODO(synk): the PRNG key is threaded via Python object state; under
        # jit/vmap this side effect would reuse the same key — thread keys
        # explicitly for traced use.
        batch_size = x.shape[0]
        idx = self._next_indices(batch_size)
        return gather_rows_lane_dense(self._data3, self._feat,
                                      self.dataset.shape[1:], idx)

    __call__ = forward


# ----------------------------------------------------------------------------
# Demo / correctness check
# ----------------------------------------------------------------------------
if __name__ == "__main__":
    key = jax.random.PRNGKey(0)
    k_data, k_x, k_mod = jax.random.split(key, 3)

    # Synthetic "dataset to impute from": 10 samples of shape (4, 16, 16).
    N, C, H, W = 10, 4, 16, 16
    dataset = jax.random.normal(k_data, (N, C, H, W), dtype=jnp.float32)

    # Input x only contributes its batch size.
    x = jax.random.normal(k_x, (2, C, H, W), dtype=jnp.float32)

    module = DatasetSamplingImputation(dataset, k_mod)
    impute = jax.block_until_ready(module(x))

    # Reference: plain-JAX gather with the same indices.
    module_ref = DatasetSamplingImputation(dataset, k_mod)
    idx_ref = module_ref._next_indices(x.shape[0])
    expected = dataset[idx_ref]

    assert impute.shape == (x.shape[0], C, H, W)
    assert impute.dtype == dataset.dtype
    assert bool(jnp.allclose(impute, expected))

    # Exercise the multi-step grids of BOTH paths with a tiny per-step block
    # (forces G=2, nsteps=4, padded tail).
    idx_multi = jnp.array([3, 1, 4, 1, 5, 9, 2], dtype=jnp.int32)
    expected_multi = dataset[idx_multi]
    out_vmem = jax.block_until_ready(
        sample_gather(dataset, idx_multi, target_block_bytes=2 * 4096))
    assert bool(jnp.allclose(out_vmem, expected_multi))
    out_dma = jax.block_until_ready(
        sample_gather(dataset, idx_multi, target_block_bytes=2 * 4096,
                      force_dma=True))
    assert bool(jnp.allclose(out_dma, expected_multi))

    # Also exercise the manual-DMA (large-dataset) path on the forward indices.
    impute_dma = jax.block_until_ready(
        sample_gather(dataset, idx_ref, force_dma=True))
    assert bool(jnp.allclose(impute_dma, expected))

    print("KERNEL_OK")
</pallas_src>

<mosaic_0001>
module attributes {stable_mosaic.version = 11 : i64} {
  func.func @_gather_vmem_kernel(%arg0: i32, %arg1: memref<2xi32, #tpu.memory_space<smem>>, %arg2: memref<10x8x128xf32, #tpu.memory_space<vmem>>, %arg3: memref<2x8x128xf32, #tpu.memory_space<vmem>>) attributes {dimension_semantics = [#tpu.dimension_semantics<parallel>], iteration_bounds = array<i64: 1>, scalar_prefetch = 1 : i64, scratch_operands = 0 : i64, tpu.core_type = #tpu.core_type<tc>, window_params = [{pipeline_mode = #tpu.pipeline_mode<synchronous>, transform_indices = @transform_0, window_bounds = array<i64: 10, 8, 128>}, {transform_indices = @transform_1, window_bounds = array<i64: 2, 8, 128>}]} {
    %c2_i32 = arith.constant 2 : i32
    %0 = arith.muli %arg0, %c2_i32 : i32
    %c0_i32 = arith.constant 0 : i32
    %1 = arith.addi %0, %c0_i32 : i32
    %2 = arith.index_cast %1 : i32 to index
    %3 = memref.load %arg1[%2] : memref<2xi32, #tpu.memory_space<smem>>
    %4 = arith.index_cast %3 : i32 to index
    %c0 = arith.constant 0 : index
    %c0_0 = arith.constant 0 : index
    %5 = vector.load %arg2[%4, %c0, %c0_0] : memref<10x8x128xf32, #tpu.memory_space<vmem>>, vector<1x8x128xf32>
    %6 = vector.shape_cast %5 : vector<1x8x128xf32> to vector<8x128xf32>
    %7 = arith.index_cast %c0_i32 : i32 to index
    %c0_1 = arith.constant 0 : index
    %c0_2 = arith.constant 0 : index
    %8 = vector.load %arg3[%7, %c0_1, %c0_2] : memref<2x8x128xf32, #tpu.memory_space<vmem>>, vector<1x8x128xf32>
    %9 = vector.shape_cast %8 : vector<1x8x128xf32> to vector<8x128xf32>
    %10 = vector.shape_cast %6 : vector<8x128xf32> to vector<1x8x128xf32>
    tpu.vector_store %arg3[%7, %c0_1, %c0_2], %10 {strides = array<i32>} : memref<2x8x128xf32, #tpu.memory_space<vmem>>, vector<1x8x128xf32>,
    %c1_i32 = arith.constant 1 : i32
    %11 = arith.addi %0, %c1_i32 : i32
    %12 = arith.index_cast %11 : i32 to index
    %13 = memref.load %arg1[%12] : memref<2xi32, #tpu.memory_space<smem>>
    %14 = arith.index_cast %13 : i32 to index
    %c0_3 = arith.constant 0 : index
    %c0_4 = arith.constant 0 : index
    %15 = vector.load %arg2[%14, %c0_3, %c0_4] : memref<10x8x128xf32, #tpu.memory_space<vmem>>, vector<1x8x128xf32>
    %16 = vector.shape_cast %15 : vector<1x8x128xf32> to vector<8x128xf32>
    %17 = arith.index_cast %c1_i32 : i32 to index
    %c0_5 = arith.constant 0 : index
    %c0_6 = arith.constant 0 : index
    %18 = vector.load %arg3[%17, %c0_5, %c0_6] : memref<2x8x128xf32, #tpu.memory_space<vmem>>, vector<1x8x128xf32>
    %19 = vector.shape_cast %18 : vector<1x8x128xf32> to vector<8x128xf32>
    %20 = vector.shape_cast %16 : vector<8x128xf32> to vector<1x8x128xf32>
    tpu.vector_store %arg3[%17, %c0_5, %c0_6], %20 {strides = array<i32>} : memref<2x8x128xf32, #tpu.memory_space<vmem>>, vector<1x8x128xf32>,
    %c2_i32_7 = arith.constant 2 : i32
    return
  }
  func.func @transform_0(%arg0: i32, %arg1: memref<2xi32, #tpu.memory_space<smem>>) -> (i32, i32, i32) {
    %c0_i32 = arith.constant 0 : i32
    %c0_i32_0 = arith.constant 0 : i32
    %c0_i32_1 = arith.constant 0 : i32
    %c0_i32_2 = arith.constant 0 : i32
    return %c0_i32, %c0_i32_0, %c0_i32_1 : i32, i32, i32
  }
  func.func @transform_1(%arg0: i32, %arg1: memref<2xi32, #tpu.memory_space<smem>>) -> (i32, i32, i32) {
    %c0_i32 = arith.constant 0 : i32
    %c0_i32_0 = arith.constant 0 : i32
    %c0_i32_1 = arith.constant 0 : i32
    return %arg0, %c0_i32, %c0_i32_0 : i32, i32, i32
  }
}

</mosaic_0001>

<llo_original>
// kernel: tpu_custom_call.1
$region0: #{tpu_custom_call.1}
  #allocation0 [shape = 'u32[]', space=smem, size = 0x4, offset = 0x4, fixed_abs, tag = 'smem constant byte address 0x4 - core index']
  #allocation1 [shape = 'u32[144,128]{1,0:T(1,128)}', space=vmem, size = 0x12000, scoped, tag = 'internal scratch']
  #allocation2 [shape = 's32[1]{0}', space=sflag, size = 0x4, scoped, tag = 'scoped memory for tpu_custom_call.1']
  #allocation3 [shape = 'u8[512]{0}', space=smem, size = 0x200, scoped, tag = 'prefetched SMEM operand 0']
  %s0 = inlined_call_operand.hbm [shape: s32[2], index: 0, kind: input, shape index: {}]
  %s1 = inlined_call_operand.hbm [shape: f32[10,8,128], index: 1, kind: input, shape index: {}]
  %s2 = inlined_call_operand.hbm [shape: f32[2,8,128], index: 2, kind: output, shape index: {}]
  %s3 = sld [smem:[#allocation0]]
  $region18: #{tpu_custom_call.1} parent=0
    _
  %s5 = ssub.s32 1, %s3
  %s6 = scalar_select 0, %s5, %s3
  %8 = dma.hbm_to_smem %s0, 16, [#allocation3], [#allocation2]
  %9 = dma.done [#allocation2], 16
  %10 = sfence
  $region1: #{tpu_custom_call.1} parent=0
    #allocation4 [shape = 'u8[40960]{0}', space=vmem, size = 0xa000, scoped, tag = 'input window, operand 1, single buffered']
    #allocation5 [shape = 's32[1]{0}', space=sflag, size = 0x4, scoped, tag = 'scoped memory for tpu_custom_call.1']
    #allocation6 [shape = 's32[1]{0}', space=sflag, size = 0x4, scoped, tag = 'scoped memory for tpu_custom_call.1']
    #allocation7 [shape = 'u8[8192]{0}', space=vmem, size = 0x2000, scoped, tag = 'output window, operand 0, single buffered']
    %11 = vsyncpa [#allocation5], 0
    %12 = vsyncpa [#allocation6], 0
    // Predicated region
    $region2: #{tpu_custom_call.1} parent=1 // pred_check
      _
    $region3: #{tpu_custom_call.1} parent=1 // pred_check_branch
      %14 = sbr.rel (0) target = $region5
    $region4: #{tpu_custom_call.1} parent=1 // pred_region
      %s16 = ssub.s32 1280, 1280
      %17 = vsyncadd [#allocation5], %s16
      %s18 = sshll.u32 [#allocation4], 4
      %s19 = int_to_ptr.vmem [resolvable:$true] %s18
      %24 = dma.hbm_to_vmem [thread:$0]  %s1, 1280, %s19, [#allocation5], 128, 128, 8
    $region5: #{tpu_custom_call.1} parent=1 // pred_fallthru
      _
    // Predicated region
    $region6: #{tpu_custom_call.1} parent=1 // pred_check
      _
    $region7: #{tpu_custom_call.1} parent=1 // pred_check_branch
      %26 = sbr.rel (0) target = $region9
    $region8: #{tpu_custom_call.1} parent=1 // pred_region
      %27 = dma.done [#allocation5], 1280
    $region9: #{tpu_custom_call.1} parent=1 // pred_fallthru
      _
    %s28 = smul.u32 0, 2
    %s29 = sld [smem:[#allocation3 + %s28]]
    %s30 = smul.u32 %s29, 8
    %s31 = scalar_lea.vmem [#allocation4], %s30
    %v32 = vld [vmem:[%s31] sm:$0xff]
    %33 = vst [vmem:[#allocation7] sm:$0xff] %v32
    %s34 = sadd.s32 %s28, 1
    %s35 = sld [smem:[#allocation3 + %s34]]
    %s36 = smul.u32 %s35, 8
    %s37 = scalar_lea.vmem [#allocation4], %s36
    %v38 = vld [vmem:[%s37] sm:$0xff]
    %s39 = scalar_lea.vmem [#allocation7], 8
    %40 = vst [vmem:[%s39] sm:$0xff] %v38
    // Predicated region
    $region10: #{tpu_custom_call.1} parent=1 // pred_check
      _
    $region11: #{tpu_custom_call.1} parent=1 // pred_check_branch
      %42 = sbr.rel (0) target = $region13
    $region12: #{tpu_custom_call.1} parent=1 // pred_region
      %s44 = ssub.s32 256, 256
      %45 = vsyncadd [#allocation6], %s44
      %s46 = sshll.u32 [#allocation7], 4
      %s47 = int_to_ptr.vmem [resolvable:$true] %s46
      %52 = dma.vmem_to_hbm [thread:$0]  %s47, 256, %s2, [#allocation6], 128, 128, 8
    $region13: #{tpu_custom_call.1} parent=1 // pred_fallthru
      _
    // Predicated region
    $region14: #{tpu_custom_call.1} parent=1 // pred_check
      _
    $region15: #{tpu_custom_call.1} parent=1 // pred_check_branch
      %54 = sbr.rel (0) target = $region17
    $region16: #{tpu_custom_call.1} parent=1 // pred_region
      %55 = dma.done [#allocation6], 256
    $region17: #{tpu_custom_call.1} parent=1 // pred_fallthru
      _
    %56 = vsyncpa [#allocation5], 1
    %57 = vsyncpa [#allocation6], 1

</llo_original>
